<compile_context>
chip_gen: v5e
topology: v5e:2x2
jax: 0.10.0
libtpu: 0.0.40
codegen_flags: <defaults>
</compile_context>

<pallas_src>
import jax
import jax.numpy as jnp
from jax.experimental import pallas as pl
from jax.experimental.pallas import tpu as pltpu

_EPS = 1e-7            # clamp epsilon (matches the PyTorch module)
_ABS_FLOOR = 1e-30     # keeps log finite; masked-out terms contribute 0 * finite
_VMEM_LIMIT_BYTES = 48 * 1024 * 1024   # safe across v5e/v6e (128 MiB) and v7x (64 MiB)


def _round_up(v, m):
    return ((v + m - 1) // m) * m


def _stacked_contrib(x, mask_t_bf16):
    """Fused MXU contribution: rows [0:tB] = sum of log|x| over masked entries,
    rows [tB:2tB] = count of negative masked entries."""
    log_ax = jnp.log(jnp.maximum(jnp.abs(x), _ABS_FLOOR))        # (tB, n) f32
    neg = (x < 0.0).astype(jnp.float32)                          # (tB, n)
    lhs = jnp.concatenate([log_ax, neg], axis=0)                 # (2*tB, n)
    mt = mask_t_bf16[...].astype(jnp.float32)                    # (n, M_pad), 0/1 exact
    # Single MXU matmul for both quantities (shared RHS).  f32 accumulation
    # keeps the negative-count exact (integers < 2^24).
    return jnp.dot(lhs, mt, preferred_element_type=jnp.float32)  # (2*tB, M_pad)


def _epilogue(acc, tb):
    """acc: (2*tb, M_pad) f32 accumulated sums -> (tb, M_pad) messages."""
    log_prod = acc[:tb, :]
    neg_cnt = acc[tb:, :]
    # Sign of the product from the parity of the (exact integer) negative count.
    parity = neg_cnt - 2.0 * jnp.floor(neg_cnt * 0.5)            # 0.0 or 1.0
    sign = 1.0 - 2.0 * parity
    p = sign * jnp.exp(log_prod)
    p = jnp.clip(p, -(1.0 - _EPS), 1.0 - _EPS)
    # 2*atanh(p) = log((1+p)/(1-p)); log1p form avoids the divide.
    return jnp.log1p(p) - jnp.log1p(-p)


def _bp_cv_kernel_single(x_ref, mask_t_ref, out_ref):
    # Whole arrays resident in VMEM; no grid machinery (launch-overhead regime).
    tb = x_ref.shape[0]
    acc = _stacked_contrib(x_ref[...], mask_t_ref)
    out_ref[...] = _epilogue(acc, tb)


def _bp_cv_kernel_tiled(x_ref, mask_t_ref, out_ref, acc_ref):
    # Grid: (batch tiles "parallel", N-reduction tiles "arbitrary").
    k = pl.program_id(1)
    tb = x_ref.shape[0]

    @pl.when(k == 0)
    def _():
        acc_ref[...] = jnp.zeros_like(acc_ref)

    acc_ref[...] += _stacked_contrib(x_ref[...], mask_t_ref)

    @pl.when(k == pl.num_programs(1) - 1)
    def _():
        out_ref[...] = _epilogue(acc_ref[...], tb)


def belief_propagation_cv(x, mask, *, block_b=None, block_n=None, force_tiled=False):
    """x: (B, N) float32, mask: (M, N) float32 0/1  ->  (B, M) float32."""
    x = x.astype(jnp.float32)
    mask = mask.astype(jnp.float32)
    B, N = x.shape
    M, Nm = mask.shape
    assert N == Nm, "mask input_dim must match x feature dim"

    # Host-side layout: mask^T, lane-padded so the output / epilogue are
    # lane-dense, shipped as bf16 (0/1 exact -> no precision loss).
    M_pad = _round_up(M, 128)
    mask_t = jnp.zeros((N, M_pad), jnp.float32).at[:, :M].set(mask.T).astype(jnp.bfloat16)

    footprint = 4 * B * N + 2 * N * M_pad + 4 * B * M_pad
    if footprint <= (4 << 20) and not force_tiled:
        # --- small-shape path: one whole-array call, no pipelining needed ---
        out = pl.pallas_call(
            _bp_cv_kernel_single,
            out_shape=jax.ShapeDtypeStruct((B, M_pad), jnp.float32),
            in_specs=[
                pl.BlockSpec(memory_space=pltpu.MemorySpace.VMEM),   # x
                pl.BlockSpec(memory_space=pltpu.MemorySpace.VMEM),   # mask^T (bf16)
            ],
            out_specs=pl.BlockSpec(memory_space=pltpu.MemorySpace.VMEM),
            compiler_params=pltpu.CompilerParams(
                vmem_limit_bytes=_VMEM_LIMIT_BYTES),
            cost_estimate=pl.CostEstimate(
                flops=4 * B * N * M_pad,
                transcendentals=B * N + 3 * B * M_pad,
                bytes_accessed=footprint),
        )(x, mask_t)
        return out[:, :M]

    # --- tiled path: batch tiles x N-reduction tiles, padded tails ---
    if block_b is None:
        if B > 1024:
            block_b = 512
        elif B > 16:
            block_b = _round_up((B + 1) // 2, 8)   # >= 2 batch tiles (v7x megacore)
        else:
            block_b = _round_up(B, 8)
    block_b = _round_up(block_b, 8)

    if block_n is None:
        # Keep full N resident if the bf16 mask tile stays well under VMEM budget,
        # otherwise tile the reduction axis.
        block_n = N if (2 * N * M_pad) <= (16 << 20) else 2048
    if block_n != N:
        block_n = _round_up(block_n, 128)

    B_pad = _round_up(B, block_b)
    N_pad = N if block_n == N else _round_up(N, block_n)
    nb = B_pad // block_b
    nk = N_pad // block_n

    # Zero padding is exact: padded x columns meet zero mask rows (contribute 0),
    # padded batch rows are sliced off below.
    x_p = x
    if B_pad != B or N_pad != N:
        x_p = jnp.zeros((B_pad, N_pad), jnp.float32).at[:B, :N].set(x)
    mask_t_p = mask_t
    if N_pad != N:
        mask_t_p = jnp.zeros((N_pad, M_pad), jnp.bfloat16).at[:N, :].set(mask_t)

    if nk == 1:
        # Batch-invariant mask^T: whole-array resident in VMEM -> single buffer,
        # no per-tile re-fetch / double-buffering.
        mask_spec = pl.BlockSpec(memory_space=pltpu.MemorySpace.VMEM)
    else:
        mask_spec = pl.BlockSpec((block_n, M_pad), lambda i, k: (k, 0))

    out = pl.pallas_call(
        _bp_cv_kernel_tiled,
        out_shape=jax.ShapeDtypeStruct((B_pad, M_pad), jnp.float32),
        grid=(nb, nk),
        in_specs=[
            pl.BlockSpec((block_b, block_n), lambda i, k: (i, k)),   # x tile
            mask_spec,                                               # mask^T
        ],
        out_specs=pl.BlockSpec((block_b, M_pad), lambda i, k: (i, 0)),
        scratch_shapes=[pltpu.VMEM((2 * block_b, M_pad), jnp.float32)],
        compiler_params=pltpu.CompilerParams(
            dimension_semantics=("parallel", "arbitrary"),
            vmem_limit_bytes=_VMEM_LIMIT_BYTES),
        cost_estimate=pl.CostEstimate(
            flops=4 * B_pad * N_pad * M_pad,
            transcendentals=B_pad * N_pad + 3 * B_pad * M_pad,
            bytes_accessed=4 * B_pad * N_pad + 2 * N_pad * M_pad * nb
            + 4 * B_pad * M_pad),
    )(x_p, mask_t_p)
    return out[:B, :M]


def belief_propagation_cv_ref(x, mask):
    """Pure-JAX reference matching the PyTorch forward exactly."""
    x_exp = x[:, None, :]
    m_exp = mask[None, :, :]
    masked = m_exp * x_exp + (1.0 - m_exp)
    prod = jnp.prod(masked, axis=-1)
    p = jnp.clip(prod, -(1.0 - _EPS), 1.0 - _EPS)
    return jnp.log((1.0 + p) / (1.0 - p))


# TODO(synk): backward pass (BeliefPropagationCV_Function.backward) is not
# implemented; this kernel covers the forward message computation only.


if __name__ == "__main__":
    key = jax.random.PRNGKey(0)
    k_x, k_m, k_x2, k_m2 = jax.random.split(key, 4)

    # Small shapes consistent with the module: input (B, input_dim),
    # mask (output_dim, input_dim).  Exercises the single-block path.
    B, N, M = 8, 128, 16
    x = jnp.tanh(jax.random.normal(k_x, (B, N), dtype=jnp.float32))
    mask = (jax.random.uniform(k_m, (M, N)) < 0.25).astype(jnp.float32)
    mask = mask.at[:, 0].set(1.0)   # every check node touches >= 1 variable node

    out = jax.block_until_ready(belief_propagation_cv(x, mask))
    ref = belief_propagation_cv_ref(x, mask)
    assert out.shape == (B, M)
    assert jnp.allclose(out, ref, atol=1e-5, rtol=1e-4), "mismatch vs reference (single block)"

    # Tiled path: batch tiles + N-reduction tiles, padded B/N tails, M lane-padded.
    B2, N2, M2 = 20, 384, 32
    x2 = jnp.tanh(jax.random.normal(k_x2, (B2, N2), dtype=jnp.float32))
    mask2 = (jax.random.uniform(k_m2, (M2, N2)) < 0.25).astype(jnp.float32)
    mask2 = mask2.at[:, 0].set(1.0)

    out2 = jax.block_until_ready(
        belief_propagation_cv(x2, mask2, block_b=8, block_n=256, force_tiled=True))
    ref2 = belief_propagation_cv_ref(x2, mask2)
    assert out2.shape == (B2, M2)
    assert jnp.allclose(out2, ref2, atol=1e-5, rtol=1e-4), "mismatch vs reference (tiled)"

    print("KERNEL_OK")
</pallas_src>

<mosaic_0001>
module attributes {stable_mosaic.version = 11 : i64} {
  func.func @_bp_cv_kernel_single(%arg0: memref<8x128xf32, #tpu.memory_space<vmem>>, %arg1: memref<128x128xbf16, #tpu.memory_space<vmem>>, %arg2: memref<8x128xf32, #tpu.memory_space<vmem>>) attributes {dimension_semantics = [], scalar_prefetch = 0 : i64, scratch_operands = 0 : i64, tpu.core_type = #tpu.core_type<tc>} {
    %c0 = arith.constant 0 : index
    %c0_0 = arith.constant 0 : index
    %0 = vector.load %arg0[%c0, %c0_0] : memref<8x128xf32, #tpu.memory_space<vmem>>, vector<8x128xf32>
    %1 = math.absf %0 : vector<8x128xf32>
    %cst = arith.constant 1.000000e-30 : f32
    %2 = vector.broadcast %cst : f32 to vector<8x128xf32>
    %3 = arith.maximumf %1, %2 : vector<8x128xf32>
    %4 = math.log %3 : vector<8x128xf32>
    %cst_1 = arith.constant 0.000000e+00 : f32
    %5 = vector.broadcast %cst_1 : f32 to vector<8x128xf32>
    %6 = arith.cmpf olt, %0, %5 : vector<8x128xf32>
    %7 = arith.extui %6 : vector<8x128xi1> to vector<8x128xi32>
    %8 = arith.sitofp %7 : vector<8x128xi32> to vector<8x128xf32>
    %9 = tpu.concatenate %4, %8 in 0 : vector<8x128xf32>, vector<8x128xf32> -> vector<16x128xf32>
    %c0_2 = arith.constant 0 : index
    %c0_3 = arith.constant 0 : index
    %10 = vector.load %arg1[%c0_2, %c0_3] : memref<128x128xbf16, #tpu.memory_space<vmem>>, vector<128x128xbf16>
    %11 = arith.extf %10 : vector<128x128xbf16> to vector<128x128xf32>
    %cst_4 = arith.constant dense<0.000000e+00> : vector<16x128xf32>
    %12 = tpu.matmul %9, %11, %cst_4 {dimension_numbers = #tpu.dot_dimension_numbers<[1], [0], [0], [1], [0, 0, 1, 1], [], []>} : vector<16x128xf32>, vector<128x128xf32>, vector<16x128xf32> -> vector<16x128xf32>
    %13 = vector.extract_strided_slice %12 {offsets = [0, 0], sizes = [8, 128], strides = [1, 1]} : vector<16x128xf32> to vector<8x128xf32>
    %14 = vector.extract_strided_slice %12 {offsets = [8, 0], sizes = [8, 128], strides = [1, 1]} : vector<16x128xf32> to vector<8x128xf32>
    %cst_5 = arith.constant 5.000000e-01 : f32
    %15 = vector.broadcast %cst_5 : f32 to vector<8x128xf32>
    %16 = arith.mulf %14, %15 : vector<8x128xf32>
    %17 = math.floor %16 : vector<8x128xf32>
    %cst_6 = arith.constant 2.000000e+00 : f32
    %18 = vector.broadcast %cst_6 : f32 to vector<8x128xf32>
    %19 = arith.mulf %18, %17 : vector<8x128xf32>
    %20 = arith.subf %14, %19 : vector<8x128xf32>
    %cst_7 = arith.constant 2.000000e+00 : f32
    %21 = vector.broadcast %cst_7 : f32 to vector<8x128xf32>
    %22 = arith.mulf %21, %20 : vector<8x128xf32>
    %cst_8 = arith.constant 1.000000e+00 : f32
    %23 = vector.broadcast %cst_8 : f32 to vector<8x128xf32>
    %24 = arith.subf %23, %22 : vector<8x128xf32>
    %25 = math.exp %13 : vector<8x128xf32>
    %26 = arith.mulf %24, %25 : vector<8x128xf32>
    %cst_9 = arith.constant -0.99999988 : f32
    %cst_10 = arith.constant 0.99999988 : f32
    %27 = vector.broadcast %cst_9 : f32 to vector<8x128xf32>
    %28 = arith.maximumf %27, %26 : vector<8x128xf32>
    %29 = vector.broadcast %cst_10 : f32 to vector<8x128xf32>
    %30 = arith.minimumf %29, %28 : vector<8x128xf32>
    %31 = math.log1p %30 : vector<8x128xf32>
    %cst_11 = arith.constant 0.000000e+00 : f32
    %32 = vector.broadcast %cst_11 : f32 to vector<8x128xf32>
    %33 = arith.subf %32, %30 : vector<8x128xf32>
    %34 = math.log1p %33 : vector<8x128xf32>
    %35 = arith.subf %31, %34 : vector<8x128xf32>
    %c0_12 = arith.constant 0 : index
    %c0_13 = arith.constant 0 : index
    %36 = vector.load %arg2[%c0_12, %c0_13] : memref<8x128xf32, #tpu.memory_space<vmem>>, vector<8x128xf32>
    tpu.vector_store %arg2[%c0_12, %c0_13], %35 {strides = array<i32>} : memref<8x128xf32, #tpu.memory_space<vmem>>, vector<8x128xf32>,
    return
  }
}

</mosaic_0001>

<llo_original>
// kernel: tpu_custom_call.1
$region0: #{tpu_custom_call.1}
  #allocation0 [shape = 'u32[]', space=smem, size = 0x4, offset = 0x4, fixed_abs, tag = 'smem constant byte address 0x4 - core index']
  #allocation1 [shape = 'u32[72,128]{1,0:T(1,128)}', space=vmem, size = 0x9000, scoped, tag = 'internal scratch']
  %s0 = inlined_call_operand.hbm [shape: f32[8,128], index: 0, kind: input, shape index: {}]
  %s1 = inlined_call_operand.hbm [shape: bf16[128,128], index: 1, kind: input, shape index: {}]
  %s2 = inlined_call_operand.hbm [shape: f32[8,128], index: 2, kind: output, shape index: {}]
  %s3 = sld [smem:[#allocation0]]
  $region26: #{tpu_custom_call.1} parent=0
    _
  %s5 = ssub.s32 1, %s3
  %s6 = scalar_select 0, %s5, %s3
  $region1: #{tpu_custom_call.1} parent=0
    #allocation2 [shape = 'u8[4096]{0}', space=vmem, size = 0x1000, scoped, tag = 'input window, operand 0, single buffered']
    #allocation3 [shape = 's32[1]{0}', space=sflag, size = 0x4, scoped, tag = 'scoped memory for tpu_custom_call.1']
    #allocation4 [shape = 's32[1]{0}', space=sflag, size = 0x4, scoped, tag = 'scoped memory for tpu_custom_call.1']
    #allocation5 [shape = 'u8[32768]{0}', space=vmem, size = 0x8000, scoped, tag = 'input window, operand 1, single buffered']
    #allocation6 [shape = 's32[1]{0}', space=sflag, size = 0x4, scoped, tag = 'scoped memory for tpu_custom_call.1']
    #allocation7 [shape = 'u8[4096]{0}', space=vmem, size = 0x1000, scoped, tag = 'output window, operand 0, single buffered']
    %7 = vsyncpa [#allocation3], 0
    %8 = vsyncpa [#allocation6], 0
    %9 = vsyncpa [#allocation4], 0
    // Predicated region
    $region2: #{tpu_custom_call.1} parent=1 // pred_check
      _
    $region3: #{tpu_custom_call.1} parent=1 // pred_check_branch
      %11 = sbr.rel (0) target = $region5
    $region4: #{tpu_custom_call.1} parent=1 // pred_region
      %13 = vsyncadd [#allocation3], 0
      %s15 = sshll.u32 %s0, 4
      %s16 = int_to_ptr.hbm [resolvable:$true] %s15
      %s17 = sshll.u32 [#allocation2], 4
      %s18 = int_to_ptr.vmem [resolvable:$true] %s17
      %20 = dma.hbm_to_vmem [thread:$0]  %s16, 128, %s18, [#allocation3]
    $region5: #{tpu_custom_call.1} parent=1 // pred_fallthru
      _
    // Predicated region
    $region6: #{tpu_custom_call.1} parent=1 // pred_check
      _
    $region7: #{tpu_custom_call.1} parent=1 // pred_check_branch
      %22 = sbr.rel (0) target = $region9
    $region8: #{tpu_custom_call.1} parent=1 // pred_region
      %24 = vsyncadd [#allocation6], 0
      %s25 = sshll.u32 %s1, 4
      %s26 = int_to_ptr.hbm [resolvable:$true] %s25
      %s27 = sshll.u32 [#allocation5], 4
      %s28 = int_to_ptr.vmem [resolvable:$true] %s27
      %33 = dma.hbm_to_vmem [thread:$0]  %s26, 1024, %s28, [#allocation6], 64, 64, 4
    $region9: #{tpu_custom_call.1} parent=1 // pred_fallthru
      _
    // Predicated region
    $region10: #{tpu_custom_call.1} parent=1 // pred_check
      _
    $region11: #{tpu_custom_call.1} parent=1 // pred_check_branch
      %35 = sbr.rel (0) target = $region13
    $region12: #{tpu_custom_call.1} parent=1 // pred_region
      %37 = dma.done [#allocation3], 128
    $region13: #{tpu_custom_call.1} parent=1 // pred_fallthru
      _
    // Predicated region
    $region14: #{tpu_custom_call.1} parent=1 // pred_check
      _
    $region15: #{tpu_custom_call.1} parent=1 // pred_check_branch
      %39 = sbr.rel (0) target = $region17
    $region16: #{tpu_custom_call.1} parent=1 // pred_region
      %41 = dma.done [#allocation6], 1024
    $region17: #{tpu_custom_call.1} parent=1 // pred_fallthru
      _
    %v42 = vld [vmem:[#allocation2] sm:$0xff]
    %v43 = vand.u32 2147483647, %v42
    %v44 = vmax.f32 %v43, 1e-30
    %v45 = vlog2.pop %v44
    %v46 = vmul.f32 %v45, 0.6931472
    %vm47 = vcmp.lt.f32.partialorder %v42, 0.0
    %v48 = vsel %vm47, 1, 0
    %v49 = vcvt.s32.f32 %v48
    %v50 = vld [vmem:[#allocation5] sm:$0xf]
    %v51 = vld [vmem:[#allocation5 + $0x4] sm:$0xf]
    %v52 = vld [vmem:[#allocation5 + $0x8] sm:$0xf]
    %v53 = vld [vmem:[#allocation5 + $0xc] sm:$0xf]
    %v54 = vld [vmem:[#allocation5 + $0x10] sm:$0xf]
    %v55 = vld [vmem:[#allocation5 + $0x14] sm:$0xf]
    %v56 = vld [vmem:[#allocation5 + $0x18] sm:$0xf]
    %v57 = vld [vmem:[#allocation5 + $0x1c] sm:$0xf]
    %v58 = vld [vmem:[#allocation5 + $0x20] sm:$0xf]
    %v59 = vld [vmem:[#allocation5 + $0x24] sm:$0xf]
    %v60 = vld [vmem:[#allocation5 + $0x28] sm:$0xf]
    %v61 = vld [vmem:[#allocation5 + $0x2c] sm:$0xf]
    %v62 = vld [vmem:[#allocation5 + $0x30] sm:$0xf]
    %v63 = vld [vmem:[#allocation5 + $0x34] sm:$0xf]
    %v64 = vld [vmem:[#allocation5 + $0x38] sm:$0xf]
    %v65 = vld [vmem:[#allocation5 + $0x3c] sm:$0xf]
    %v66 = vunpack.c.l.bf16 %v50
    %v67 = vunpack.c.l.bf16 %v51
    %v68 = vunpack.c.l.bf16 %v52
    %v69 = vunpack.c.l.bf16 %v53
    %v70 = vunpack.c.l.bf16 %v54
    %v71 = vunpack.c.l.bf16 %v55
    %v72 = vunpack.c.l.bf16 %v56
    %v73 = vunpack.c.l.bf16 %v57
    %v74 = vunpack.c.l.bf16 %v58
    %v75 = vunpack.c.l.bf16 %v59
    %v76 = vunpack.c.l.bf16 %v60
    %v77 = vunpack.c.l.bf16 %v61
    %v78 = vunpack.c.l.bf16 %v62
    %v79 = vunpack.c.l.bf16 %v63
    %v80 = vunpack.c.l.bf16 %v64
    %v81 = vunpack.c.l.bf16 %v65
    %82 = vmatpush.msra.mxu0 %v81
    %83 = vmatpush.msra.mxu0 %v80
    %84 = vmatpush.msra.mxu0 %v79
    %85 = vmatpush.msra.mxu0 %v78
    %86 = vmatpush.msra.mxu0 %v77
    %87 = vmatpush.msra.mxu0 %v76
    %88 = vmatpush.msra.mxu0 %v75
    %89 = vmatpush.msra.mxu0 %v74
    %90 = vmatpush.msra.mxu0 %v73
    %91 = vmatpush.msra.mxu0 %v72
    %92 = vmatpush.msra.mxu0 %v71
    %93 = vmatpush.msra.mxu0 %v70
    %94 = vmatpush.msra.mxu0 %v69
    %95 = vmatpush.msra.mxu0 %v68
    %96 = vmatpush.msra.mxu0 %v67
    %97 = vmatpush.msra.mxu0 %v66
    %98 = vmatmul.f32.gmra.mxu0 %v46
    %v99 = vpop.f32.mrf.mxu0
    %v100 = vadd.f32 0.0, %v99
    %101 = vmatmul.f32.gmra.mxu0 %v49
    %v102 = vpop.f32.mrf.mxu0
    %v103 = vadd.f32 0.0, %v102
    %104 = vdwg.mxu0
    %v105 = vmul.f32 %v103, 0.5
    %v106 = vfloor.f32 %v105
    %v107 = vmul.f32 %v106, 2.0
    %v108 = vsub.f32 %v103, %v107
    %v109 = vmul.f32 %v108, 2.0
    %v110 = vsub.f32 1.0, %v109
    %v111 = vmul.f32 %v100, 1.442695
    %v112 = vpow.pop %v111
    %v113 = vmul.f32 %v110, %v112
    %v114 = vmax.f32 %v113, -0.9999999
    %v115 = vmin.f32 %v114, 0.9999999
    %v116 = vadd.f32 %v115, 1.0
    %v117 = vlog2.pop %v116
    %v118 = vmul.f32 %v117, 0.6931472
    %v119 = vmul.f32 -0.5, %v115
    %v120 = vadd.f32 %v119, 1.0
    %v121 = vmul.f32 %v120, %v115
    %v122 = vand.u32 2147483647, %v115
    %vm123 = vcmp.lt.f32.partialorder %v122, 0.0004427343
    %v124 = vsel %vm123, %v121, %v118
    %v125 = vsub.f32 0.0, %v115
    %v126 = vadd.f32 %v125, 1.0
    %v127 = vlog2.pop %v126
    %v128 = vmul.f32 %v127, 0.6931472
    %v129 = vmul.f32 -0.5, %v125
    %v130 = vadd.f32 %v129, 1.0
    %v131 = vmul.f32 %v130, %v125
    %v132 = vand.u32 2147483647, %v125
    %vm133 = vcmp.lt.f32.partialorder %v132, 0.0004427343
    %v134 = vsel %vm133, %v131, %v128
    %v135 = vsub.f32 %v124, %v134
    %136 = vst [vmem:[#allocation7] sm:$0xff] %v135
    // Predicated region
    $region18: #{tpu_custom_call.1} parent=1 // pred_check
      _
    $region19: #{tpu_custom_call.1} parent=1 // pred_check_branch
      %138 = sbr.rel (0) target = $region21
    $region20: #{tpu_custom_call.1} parent=1 // pred_region
      %140 = vsyncadd [#allocation4], 0
      %s142 = sshll.u32 [#allocation7], 4
      %s143 = int_to_ptr.vmem [resolvable:$true] %s142
      %s144 = sshll.u32 %s2, 4
      %s145 = int_to_ptr.hbm [resolvable:$true] %s144
      %147 = dma.vmem_to_hbm [thread:$0]  %s143, 128, %s145, [#allocation4]
    $region21: #{tpu_custom_call.1} parent=1 // pred_fallthru
      _
    // Predicated region
    $region22: #{tpu_custom_call.1} parent=1 // pred_check
      _
    $region23: #{tpu_custom_call.1} parent=1 // pred_check_branch
      %149 = sbr.rel (0) target = $region25
    $region24: #{tpu_custom_call.1} parent=1 // pred_region
      %151 = dma.done [#allocation4], 128
    $region25: #{tpu_custom_call.1} parent=1 // pred_fallthru
      _
    %152 = vsyncpa [#allocation3], 1
    %153 = vsyncpa [#allocation6], 1
    %154 = vsyncpa [#allocation4], 1

</llo_original>
